<compile_context>
chip_gen: v5e
topology: v5e:2x2
jax: 0.10.0
libtpu: 0.0.40
codegen_flags: <defaults>
</compile_context>

<pallas_src>
import functools

import jax
import jax.numpy as jnp
from jax import lax
from jax.experimental import pallas as pl
from jax.experimental.pallas import tpu as pltpu

_PADL = 128  # lane-aligned left border of the flat line buffer (>= W + 1)


def resblock_kernel(x_ref, w1_ref, b1_ref, w2_ref, b2_ref, o_ref,
                    pad_ref, stk_ref, *, H, W):
    # x_ref  : (C, H*W)            flattened NCHW input for one batch element
    # w*_ref : (C, 9*C)            tap-major weights, column = t*C_in + c_in,
    #                              tap t = kh*3 + kw
    # b*_ref : (C, 1)              biases (column, broadcast over H*W)
    # o_ref  : (C, H*W)            output block (lane-dense last dim)
    # pad_ref: VMEM (C, 128+HW+128) flat zero-padded line buffer (scratch)
    # stk_ref: VMEM (9*C, HW)      im2col stacked operand (scratch)
    C = x_ref.shape[0]
    HW = H * W

    x = x_ref[...].astype(jnp.float32)           # (C, HW)
    w1 = w1_ref[...].astype(jnp.float32)         # (C, 9C)
    w2 = w2_ref[...].astype(jnp.float32)
    b1 = b1_ref[...].astype(jnp.float32)         # (C, 1)
    b2 = b2_ref[...].astype(jnp.float32)

    # Column-border masks, computed once and shared by both convolutions.
    # (Row borders are handled by the zero border strips of the line buffer.)
    col = lax.broadcasted_iota(jnp.int32, (1, HW), 1) % W
    keep_for_dx = {-1: col > 0, 0: None, 1: col < (W - 1)}

    # Zero only the two 128-lane border strips (unmasked, lane-aligned stores);
    # the interior [PADL, PADL+HW) is fully overwritten by each conv below.
    right = pad_ref.shape[1] - (_PADL + HW)
    pad_ref[:, :_PADL] = jnp.zeros((C, _PADL), jnp.float32)
    pad_ref[:, _PADL + HW:] = jnp.zeros((C, right), jnp.float32)

    def conv3x3(inp, w_flat, b):
        # inp: (C, HW) f32  ->  conv + bias (no activation), (C, HW) f32
        pad_ref[:, _PADL:_PADL + HW] = inp       # lane-aligned interior store
        t = 0
        for dy in (-1, 0, 1):
            for dx in (-1, 0, 1):
                start = _PADL + dy * W + dx                # static lane offset
                shifted = pad_ref[:, start:start + HW]     # (C, HW)
                keep = keep_for_dx[dx]
                if keep is not None:
                    shifted = jnp.where(keep, shifted, 0.0)
                stk_ref[t * C:(t + 1) * C, :] = shifted    # im2col band
                t += 1
        # Single MXU contraction over 9*C instead of 9 tiny matmuls.
        return jnp.dot(w_flat, stk_ref[...],
                       preferred_element_type=jnp.float32) + b

    # conv1 -> (Identity bn) -> ReLU
    h = jnp.maximum(conv3x3(x, w1, b1), 0.0)
    # conv2 -> + residual -> ReLU
    out = jnp.maximum(conv3x3(h, w2, b2) + x, 0.0)

    o_ref[...] = out.astype(o_ref.dtype)


@jax.jit
def resblock_plain_pallas(x_nchw, w1, b1, w2, b2):
    """Forward of ResBlockPlain(use_bn=False).

    x_nchw: (B, C, H, W) f32 | w*: (C_out, C_in, 3, 3) | b*: (C,)
    Returns (B, C, H, W) f32.
    """
    B, C, H, W = x_nchw.shape
    HW = H * W
    assert W + 1 <= _PADL, "flat border must cover one image row + 1"

    # Wrapper glue is reshape-only for the activation tensor.
    x_flat = x_nchw.reshape(B, C, HW)
    # Weights -> (C_out, 9*C_in), tap-major: column index = (kh*3+kw)*C + c_in.
    w1_flat = jnp.transpose(w1, (0, 2, 3, 1)).reshape(C, 9 * C)
    w2_flat = jnp.transpose(w2, (0, 2, 3, 1)).reshape(C, 9 * C)
    b1_col = b1.reshape(C, 1)
    b2_col = b2.reshape(C, 1)

    kernel = functools.partial(resblock_kernel, H=H, W=W)

    out_flat = pl.pallas_call(
        kernel,
        out_shape=jax.ShapeDtypeStruct((B, C, HW), x_nchw.dtype),
        grid=(B,),
        in_specs=[
            pl.BlockSpec((None, C, HW), lambda b: (b, 0, 0)),
            pl.BlockSpec((C, 9 * C), lambda b: (0, 0)),
            pl.BlockSpec((C, 1), lambda b: (0, 0)),
            pl.BlockSpec((C, 9 * C), lambda b: (0, 0)),
            pl.BlockSpec((C, 1), lambda b: (0, 0)),
        ],
        out_specs=pl.BlockSpec((None, C, HW), lambda b: (b, 0, 0)),
        scratch_shapes=[
            pltpu.VMEM((C, _PADL + HW + 128), jnp.float32),  # line buffer
            pltpu.VMEM((9 * C, HW), jnp.float32),            # im2col stack
        ],
        compiler_params=pltpu.CompilerParams(
            dimension_semantics=("parallel",)),
    )(x_flat, w1_flat, b1_col, w2_flat, b2_col)

    return out_flat.reshape(B, C, H, W)


def _reference(x, w1, b1, w2, b2):
    """Plain-JAX reference matching the PyTorch forward (NCHW convs)."""
    dn = ("NCHW", "OIHW", "NCHW")
    prec = lax.Precision.HIGHEST
    h = lax.conv_general_dilated(x, w1, (1, 1), "SAME", dimension_numbers=dn,
                                 precision=prec) + b1.reshape(1, -1, 1, 1)
    h = jnp.maximum(h, 0.0)
    o = lax.conv_general_dilated(h, w2, (1, 1), "SAME", dimension_numbers=dn,
                                 precision=prec) + b2.reshape(1, -1, 1, 1)
    return jnp.maximum(o + x, 0.0)


if __name__ == "__main__":
    B, C, H, W = 2, 4, 16, 16

    key = jax.random.PRNGKey(0)
    kx, kw1, kb1, kw2, kb2 = jax.random.split(key, 5)

    x = jax.random.normal(kx, (B, C, H, W), dtype=jnp.float32)

    # PyTorch-default-like uniform(-k, k), k = 1/sqrt(C*3*3)
    k = 1.0 / jnp.sqrt(jnp.float32(C * 3 * 3))
    w1 = jax.random.uniform(kw1, (C, C, 3, 3), jnp.float32, -k, k)
    b1 = jax.random.uniform(kb1, (C,), jnp.float32, -k, k)
    w2 = jax.random.uniform(kw2, (C, C, 3, 3), jnp.float32, -k, k)
    b2 = jax.random.uniform(kb2, (C,), jnp.float32, -k, k)

    out = jax.block_until_ready(resblock_plain_pallas(x, w1, b1, w2, b2))

    ref = _reference(x, w1, b1, w2, b2)
    assert out.shape == (B, C, H, W), out.shape
    max_err = jnp.max(jnp.abs(out - ref))
    assert jnp.allclose(out, ref, atol=1e-3, rtol=1e-3), f"max err {max_err}"

    print("KERNEL_OK")
</pallas_src>

<mosaic_0001>
module attributes {stable_mosaic.version = 11 : i64} {
  func.func @resblock_kernel(%arg0: i32, %arg1: memref<1x4x256xf32, #tpu.memory_space<vmem>>, %arg2: memref<4x36xf32, #tpu.memory_space<vmem>>, %arg3: memref<4x1xf32, #tpu.memory_space<vmem>>, %arg4: memref<4x36xf32, #tpu.memory_space<vmem>>, %arg5: memref<4x1xf32, #tpu.memory_space<vmem>>, %arg6: memref<1x4x256xf32, #tpu.memory_space<vmem>>, %arg7: memref<4x512xf32, #tpu.memory_space<vmem>>, %arg8: memref<36x256xf32, #tpu.memory_space<vmem>>) attributes {dimension_semantics = [#tpu.dimension_semantics<parallel>], iteration_bounds = array<i64: 2>, scalar_prefetch = 0 : i64, scratch_operands = 2 : i64, tpu.core_type = #tpu.core_type<tc>, window_params = [{transform_indices = @transform_0, window_bounds = array<i64: 1, 4, 256>}, {pipeline_mode = #tpu.pipeline_mode<synchronous>, transform_indices = @transform_1, window_bounds = array<i64: 4, 36>}, {pipeline_mode = #tpu.pipeline_mode<synchronous>, transform_indices = @transform_2, window_bounds = array<i64: 4, 1>}, {pipeline_mode = #tpu.pipeline_mode<synchronous>, transform_indices = @transform_3, window_bounds = array<i64: 4, 36>}, {pipeline_mode = #tpu.pipeline_mode<synchronous>, transform_indices = @transform_4, window_bounds = array<i64: 4, 1>}, {transform_indices = @transform_5, window_bounds = array<i64: 1, 4, 256>}]} {
    %c0 = arith.constant 0 : index
    %c0_0 = arith.constant 0 : index
    %c0_1 = arith.constant 0 : index
    %0 = vector.load %arg1[%c0, %c0_0, %c0_1] : memref<1x4x256xf32, #tpu.memory_space<vmem>>, vector<1x4x256xf32>
    %1 = vector.shape_cast %0 : vector<1x4x256xf32> to vector<4x256xf32>
    %c0_2 = arith.constant 0 : index
    %c0_3 = arith.constant 0 : index
    %2 = vector.load %arg2[%c0_2, %c0_3] : memref<4x36xf32, #tpu.memory_space<vmem>>, vector<4x36xf32>
    %c0_4 = arith.constant 0 : index
    %c0_5 = arith.constant 0 : index
    %3 = vector.load %arg4[%c0_4, %c0_5] : memref<4x36xf32, #tpu.memory_space<vmem>>, vector<4x36xf32>
    %c0_6 = arith.constant 0 : index
    %c0_7 = arith.constant 0 : index
    %4 = vector.load %arg3[%c0_6, %c0_7] : memref<4x1xf32, #tpu.memory_space<vmem>>, vector<4x1xf32>
    %c0_8 = arith.constant 0 : index
    %c0_9 = arith.constant 0 : index
    %5 = vector.load %arg5[%c0_8, %c0_9] : memref<4x1xf32, #tpu.memory_space<vmem>>, vector<4x1xf32>
    %6 = tpu.iota {dimensions = array<i32: 1>} : vector<1x256xi32>
    %c16_i32 = arith.constant 16 : i32
    %c0_i32 = arith.constant 0 : i32
    %7 = arith.cmpi eq, %c16_i32, %c0_i32 : i32
    %c1_i32 = arith.constant 1 : i32
    %8 = arith.select %7, %c1_i32, %c16_i32 : i32
    %9 = vector.broadcast %8 : i32 to vector<1x256xi32>
    %10 = arith.remsi %6, %9 : vector<1x256xi32>
    %c0_i32_10 = arith.constant 0 : i32
    %11 = vector.broadcast %c0_i32_10 : i32 to vector<1x256xi32>
    %12 = arith.cmpi ne, %10, %11 : vector<1x256xi32>
    %c0_i32_11 = arith.constant 0 : i32
    %13 = vector.broadcast %c0_i32_11 : i32 to vector<1x256xi32>
    %14 = arith.cmpi slt, %10, %13 : vector<1x256xi32>
    %c0_i32_12 = arith.constant 0 : i32
    %15 = arith.cmpi slt, %8, %c0_i32_12 : i32
    %16 = vector.broadcast %15 : i1 to vector<1x256xi1>
    %17 = vector.broadcast %16 : vector<1x256xi1> to vector<1x256xi1>
    %18 = arith.xori %14, %17 : vector<1x256xi1>
    %19 = arith.andi %18, %12 : vector<1x256xi1>
    %20 = vector.broadcast %8 : i32 to vector<1x256xi32>
    %21 = arith.addi %10, %20 : vector<1x256xi32>
    %22 = arith.select %19, %21, %10 : vector<1x256xi1>, vector<1x256xi32>
    %c0_i32_13 = arith.constant 0 : i32
    %23 = vector.broadcast %c0_i32_13 : i32 to vector<1x256xi32>
    %24 = arith.cmpi sgt, %22, %23 : vector<1x256xi32>
    %c15_i32 = arith.constant 15 : i32
    %25 = vector.broadcast %c15_i32 : i32 to vector<1x256xi32>
    %26 = arith.cmpi slt, %22, %25 : vector<1x256xi32>
    %cst = arith.constant 0.000000e+00 : f32
    %27 = vector.broadcast %cst : f32 to vector<4x128xf32>
    %c0_14 = arith.constant 0 : index
    %c0_15 = arith.constant 0 : index
    %28 = vector.load %arg7[%c0_14, %c0_15] : memref<4x512xf32, #tpu.memory_space<vmem>>, vector<4x128xf32>
    tpu.vector_store %arg7[%c0_14, %c0_15], %27 {strides = array<i32>} : memref<4x512xf32, #tpu.memory_space<vmem>>, vector<4x128xf32>,
    %cst_16 = arith.constant 0.000000e+00 : f32
    %29 = vector.broadcast %cst_16 : f32 to vector<4x128xf32>
    %c0_17 = arith.constant 0 : index
    %c384 = arith.constant 384 : index
    %30 = vector.load %arg7[%c0_17, %c384] : memref<4x512xf32, #tpu.memory_space<vmem>>, vector<4x128xf32>
    tpu.vector_store %arg7[%c0_17, %c384], %29 {strides = array<i32>} : memref<4x512xf32, #tpu.memory_space<vmem>>, vector<4x128xf32>,
    %c0_18 = arith.constant 0 : index
    %c128 = arith.constant 128 : index
    %31 = vector.load %arg7[%c0_18, %c128] : memref<4x512xf32, #tpu.memory_space<vmem>>, vector<4x256xf32>
    tpu.vector_store %arg7[%c0_18, %c128], %1 {strides = array<i32>} : memref<4x512xf32, #tpu.memory_space<vmem>>, vector<4x256xf32>,
    %c0_19 = arith.constant 0 : index
    %c111 = arith.constant 111 : index
    %32 = vector.load %arg7[%c0_19, %c111] : memref<4x512xf32, #tpu.memory_space<vmem>>, vector<4x256xf32>
    %cst_20 = arith.constant 0.000000e+00 : f32
    %33 = vector.shape_cast %24 : vector<1x256xi1> to vector<1x256xi1>
    %34 = vector.broadcast %33 : vector<1x256xi1> to vector<4x256xi1>
    %35 = vector.broadcast %cst_20 : f32 to vector<4x256xf32>
    %36 = arith.select %34, %32, %35 : vector<4x256xi1>, vector<4x256xf32>
    %c0_21 = arith.constant 0 : index
    %c0_22 = arith.constant 0 : index
    %37 = vector.load %arg8[%c0_21, %c0_22] : memref<36x256xf32, #tpu.memory_space<vmem>>, vector<4x256xf32>
    tpu.vector_store %arg8[%c0_21, %c0_22], %36 {strides = array<i32>} : memref<36x256xf32, #tpu.memory_space<vmem>>, vector<4x256xf32>,
    %c0_23 = arith.constant 0 : index
    %c112 = arith.constant 112 : index
    %38 = vector.load %arg7[%c0_23, %c112] : memref<4x512xf32, #tpu.memory_space<vmem>>, vector<4x256xf32>
    %c4 = arith.constant 4 : index
    %c0_24 = arith.constant 0 : index
    %39 = vector.load %arg8[%c4, %c0_24] : memref<36x256xf32, #tpu.memory_space<vmem>>, vector<4x256xf32>
    tpu.vector_store %arg8[%c4, %c0_24], %38 {strides = array<i32>} : memref<36x256xf32, #tpu.memory_space<vmem>>, vector<4x256xf32>,
    %c0_25 = arith.constant 0 : index
    %c113 = arith.constant 113 : index
    %40 = vector.load %arg7[%c0_25, %c113] : memref<4x512xf32, #tpu.memory_space<vmem>>, vector<4x256xf32>
    %cst_26 = arith.constant 0.000000e+00 : f32
    %41 = vector.shape_cast %26 : vector<1x256xi1> to vector<1x256xi1>
    %42 = vector.broadcast %41 : vector<1x256xi1> to vector<4x256xi1>
    %43 = vector.broadcast %cst_26 : f32 to vector<4x256xf32>
    %44 = arith.select %42, %40, %43 : vector<4x256xi1>, vector<4x256xf32>
    %c8 = arith.constant 8 : index
    %c0_27 = arith.constant 0 : index
    %45 = vector.load %arg8[%c8, %c0_27] : memref<36x256xf32, #tpu.memory_space<vmem>>, vector<4x256xf32>
    tpu.vector_store %arg8[%c8, %c0_27], %44 {strides = array<i32>} : memref<36x256xf32, #tpu.memory_space<vmem>>, vector<4x256xf32>,
    %c0_28 = arith.constant 0 : index
    %c127 = arith.constant 127 : index
    %46 = vector.load %arg7[%c0_28, %c127] : memref<4x512xf32, #tpu.memory_space<vmem>>, vector<4x256xf32>
    %cst_29 = arith.constant 0.000000e+00 : f32
    %47 = vector.shape_cast %24 : vector<1x256xi1> to vector<1x256xi1>
    %48 = vector.broadcast %47 : vector<1x256xi1> to vector<4x256xi1>
    %49 = vector.broadcast %cst_29 : f32 to vector<4x256xf32>
    %50 = arith.select %48, %46, %49 : vector<4x256xi1>, vector<4x256xf32>
    %c12 = arith.constant 12 : index
    %c0_30 = arith.constant 0 : index
    %51 = vector.load %arg8[%c12, %c0_30] : memref<36x256xf32, #tpu.memory_space<vmem>>, vector<4x256xf32>
    tpu.vector_store %arg8[%c12, %c0_30], %50 {strides = array<i32>} : memref<36x256xf32, #tpu.memory_space<vmem>>, vector<4x256xf32>,
    %c0_31 = arith.constant 0 : index
    %c128_32 = arith.constant 128 : index
    %52 = vector.load %arg7[%c0_31, %c128_32] : memref<4x512xf32, #tpu.memory_space<vmem>>, vector<4x256xf32>
    %c16 = arith.constant 16 : index
    %c0_33 = arith.constant 0 : index
    %53 = vector.load %arg8[%c16, %c0_33] : memref<36x256xf32, #tpu.memory_space<vmem>>, vector<4x256xf32>
    tpu.vector_store %arg8[%c16, %c0_33], %52 {strides = array<i32>} : memref<36x256xf32, #tpu.memory_space<vmem>>, vector<4x256xf32>,
    %c0_34 = arith.constant 0 : index
    %c129 = arith.constant 129 : index
    %54 = vector.load %arg7[%c0_34, %c129] : memref<4x512xf32, #tpu.memory_space<vmem>>, vector<4x256xf32>
    %cst_35 = arith.constant 0.000000e+00 : f32
    %55 = vector.shape_cast %26 : vector<1x256xi1> to vector<1x256xi1>
    %56 = vector.broadcast %55 : vector<1x256xi1> to vector<4x256xi1>
    %57 = vector.broadcast %cst_35 : f32 to vector<4x256xf32>
    %58 = arith.select %56, %54, %57 : vector<4x256xi1>, vector<4x256xf32>
    %c20 = arith.constant 20 : index
    %c0_36 = arith.constant 0 : index
    %59 = vector.load %arg8[%c20, %c0_36] : memref<36x256xf32, #tpu.memory_space<vmem>>, vector<4x256xf32>
    tpu.vector_store %arg8[%c20, %c0_36], %58 {strides = array<i32>} : memref<36x256xf32, #tpu.memory_space<vmem>>, vector<4x256xf32>,
    %c0_37 = arith.constant 0 : index
    %c143 = arith.constant 143 : index
    %60 = vector.load %arg7[%c0_37, %c143] : memref<4x512xf32, #tpu.memory_space<vmem>>, vector<4x256xf32>
    %cst_38 = arith.constant 0.000000e+00 : f32
    %61 = vector.shape_cast %24 : vector<1x256xi1> to vector<1x256xi1>
    %62 = vector.broadcast %61 : vector<1x256xi1> to vector<4x256xi1>
    %63 = vector.broadcast %cst_38 : f32 to vector<4x256xf32>
    %64 = arith.select %62, %60, %63 : vector<4x256xi1>, vector<4x256xf32>
    %c24 = arith.constant 24 : index
    %c0_39 = arith.constant 0 : index
    %65 = vector.load %arg8[%c24, %c0_39] : memref<36x256xf32, #tpu.memory_space<vmem>>, vector<4x256xf32>
    tpu.vector_store %arg8[%c24, %c0_39], %64 {strides = array<i32>} : memref<36x256xf32, #tpu.memory_space<vmem>>, vector<4x256xf32>,
    %c0_40 = arith.constant 0 : index
    %c144 = arith.constant 144 : index
    %66 = vector.load %arg7[%c0_40, %c144] : memref<4x512xf32, #tpu.memory_space<vmem>>, vector<4x256xf32>
    %c28 = arith.constant 28 : index
    %c0_41 = arith.constant 0 : index
    %67 = vector.load %arg8[%c28, %c0_41] : memref<36x256xf32, #tpu.memory_space<vmem>>, vector<4x256xf32>
    tpu.vector_store %arg8[%c28, %c0_41], %66 {strides = array<i32>} : memref<36x256xf32, #tpu.memory_space<vmem>>, vector<4x256xf32>,
    %c0_42 = arith.constant 0 : index
    %c145 = arith.constant 145 : index
    %68 = vector.load %arg7[%c0_42, %c145] : memref<4x512xf32, #tpu.memory_space<vmem>>, vector<4x256xf32>
    %cst_43 = arith.constant 0.000000e+00 : f32
    %69 = vector.shape_cast %26 : vector<1x256xi1> to vector<1x256xi1>
    %70 = vector.broadcast %69 : vector<1x256xi1> to vector<4x256xi1>
    %71 = vector.broadcast %cst_43 : f32 to vector<4x256xf32>
    %72 = arith.select %70, %68, %71 : vector<4x256xi1>, vector<4x256xf32>
    %c32 = arith.constant 32 : index
    %c0_44 = arith.constant 0 : index
    %73 = vector.load %arg8[%c32, %c0_44] : memref<36x256xf32, #tpu.memory_space<vmem>>, vector<4x256xf32>
    tpu.vector_store %arg8[%c32, %c0_44], %72 {strides = array<i32>} : memref<36x256xf32, #tpu.memory_space<vmem>>, vector<4x256xf32>,
    %c0_45 = arith.constant 0 : index
    %c0_46 = arith.constant 0 : index
    %74 = vector.load %arg8[%c0_45, %c0_46] : memref<36x256xf32, #tpu.memory_space<vmem>>, vector<36x256xf32>
    %cst_47 = arith.constant dense<0.000000e+00> : vector<4x256xf32>
    %75 = tpu.matmul %2, %74, %cst_47 {dimension_numbers = #tpu.dot_dimension_numbers<[1], [0], [0], [1], [0, 0, 1, 1], [], []>} : vector<4x36xf32>, vector<36x256xf32>, vector<4x256xf32> -> vector<4x256xf32>
    %76 = vector.broadcast %4 : vector<4x1xf32> to vector<4x256xf32>
    %77 = arith.addf %75, %76 : vector<4x256xf32>
    %cst_48 = arith.constant 0.000000e+00 : f32
    %78 = vector.broadcast %cst_48 : f32 to vector<4x256xf32>
    %79 = arith.maximumf %77, %78 : vector<4x256xf32>
    %c0_49 = arith.constant 0 : index
    %c128_50 = arith.constant 128 : index
    %80 = vector.load %arg7[%c0_49, %c128_50] : memref<4x512xf32, #tpu.memory_space<vmem>>, vector<4x256xf32>
    tpu.vector_store %arg7[%c0_49, %c128_50], %79 {strides = array<i32>} : memref<4x512xf32, #tpu.memory_space<vmem>>, vector<4x256xf32>,
    %c0_51 = arith.constant 0 : index
    %c111_52 = arith.constant 111 : index
    %81 = vector.load %arg7[%c0_51, %c111_52] : memref<4x512xf32, #tpu.memory_space<vmem>>, vector<4x256xf32>
    %cst_53 = arith.constant 0.000000e+00 : f32
    %82 = vector.shape_cast %24 : vector<1x256xi1> to vector<1x256xi1>
    %83 = vector.broadcast %82 : vector<1x256xi1> to vector<4x256xi1>
    %84 = vector.broadcast %cst_53 : f32 to vector<4x256xf32>
    %85 = arith.select %83, %81, %84 : vector<4x256xi1>, vector<4x256xf32>
    %c0_54 = arith.constant 0 : index
    %c0_55 = arith.constant 0 : index
    %86 = vector.load %arg8[%c0_54, %c0_55] : memref<36x256xf32, #tpu.memory_space<vmem>>, vector<4x256xf32>
    tpu.vector_store %arg8[%c0_54, %c0_55], %85 {strides = array<i32>} : memref<36x256xf32, #tpu.memory_space<vmem>>, vector<4x256xf32>,
    %c0_56 = arith.constant 0 : index
    %c112_57 = arith.constant 112 : index
    %87 = vector.load %arg7[%c0_56, %c112_57] : memref<4x512xf32, #tpu.memory_space<vmem>>, vector<4x256xf32>
    %c4_58 = arith.constant 4 : index
    %c0_59 = arith.constant 0 : index
    %88 = vector.load %arg8[%c4_58, %c0_59] : memref<36x256xf32, #tpu.memory_space<vmem>>, vector<4x256xf32>
    tpu.vector_store %arg8[%c4_58, %c0_59], %87 {strides = array<i32>} : memref<36x256xf32, #tpu.memory_space<vmem>>, vector<4x256xf32>,
    %c0_60 = arith.constant 0 : index
    %c113_61 = arith.constant 113 : index
    %89 = vector.load %arg7[%c0_60, %c113_61] : memref<4x512xf32, #tpu.memory_space<vmem>>, vector<4x256xf32>
    %cst_62 = arith.constant 0.000000e+00 : f32
    %90 = vector.shape_cast %26 : vector<1x256xi1> to vector<1x256xi1>
    %91 = vector.broadcast %90 : vector<1x256xi1> to vector<4x256xi1>
    %92 = vector.broadcast %cst_62 : f32 to vector<4x256xf32>
    %93 = arith.select %91, %89, %92 : vector<4x256xi1>, vector<4x256xf32>
    %c8_63 = arith.constant 8 : index
    %c0_64 = arith.constant 0 : index
    %94 = vector.load %arg8[%c8_63, %c0_64] : memref<36x256xf32, #tpu.memory_space<vmem>>, vector<4x256xf32>
    tpu.vector_store %arg8[%c8_63, %c0_64], %93 {strides = array<i32>} : memref<36x256xf32, #tpu.memory_space<vmem>>, vector<4x256xf32>,
    %c0_65 = arith.constant 0 : index
    %c127_66 = arith.constant 127 : index
    %95 = vector.load %arg7[%c0_65, %c127_66] : memref<4x512xf32, #tpu.memory_space<vmem>>, vector<4x256xf32>
    %cst_67 = arith.constant 0.000000e+00 : f32
    %96 = vector.shape_cast %24 : vector<1x256xi1> to vector<1x256xi1>
    %97 = vector.broadcast %96 : vector<1x256xi1> to vector<4x256xi1>
    %98 = vector.broadcast %cst_67 : f32 to vector<4x256xf32>
    %99 = arith.select %97, %95, %98 : vector<4x256xi1>, vector<4x256xf32>
    %c12_68 = arith.constant 12 : index
    %c0_69 = arith.constant 0 : index
    %100 = vector.load %arg8[%c12_68, %c0_69] : memref<36x256xf32, #tpu.memory_space<vmem>>, vector<4x256xf32>
    tpu.vector_store %arg8[%c12_68, %c0_69], %99 {strides = array<i32>} : memref<36x256xf32, #tpu.memory_space<vmem>>, vector<4x256xf32>,
    %c0_70 = arith.constant 0 : index
    %c128_71 = arith.constant 128 : index
    %101 = vector.load %arg7[%c0_70, %c128_71] : memref<4x512xf32, #tpu.memory_space<vmem>>, vector<4x256xf32>
    %c16_72 = arith.constant 16 : index
    %c0_73 = arith.constant 0 : index
    %102 = vector.load %arg8[%c16_72, %c0_73] : memref<36x256xf32, #tpu.memory_space<vmem>>, vector<4x256xf32>
    tpu.vector_store %arg8[%c16_72, %c0_73], %101 {strides = array<i32>} : memref<36x256xf32, #tpu.memory_space<vmem>>, vector<4x256xf32>,
    %c0_74 = arith.constant 0 : index
    %c129_75 = arith.constant 129 : index
    %103 = vector.load %arg7[%c0_74, %c129_75] : memref<4x512xf32, #tpu.memory_space<vmem>>, vector<4x256xf32>
    %cst_76 = arith.constant 0.000000e+00 : f32
    %104 = vector.shape_cast %26 : vector<1x256xi1> to vector<1x256xi1>
    %105 = vector.broadcast %104 : vector<1x256xi1> to vector<4x256xi1>
    %106 = vector.broadcast %cst_76 : f32 to vector<4x256xf32>
    %107 = arith.select %105, %103, %106 : vector<4x256xi1>, vector<4x256xf32>
    %c20_77 = arith.constant 20 : index
    %c0_78 = arith.constant 0 : index
    %108 = vector.load %arg8[%c20_77, %c0_78] : memref<36x256xf32, #tpu.memory_space<vmem>>, vector<4x256xf32>
    tpu.vector_store %arg8[%c20_77, %c0_78], %107 {strides = array<i32>} : memref<36x256xf32, #tpu.memory_space<vmem>>, vector<4x256xf32>,
    %c0_79 = arith.constant 0 : index
    %c143_80 = arith.constant 143 : index
    %109 = vector.load %arg7[%c0_79, %c143_80] : memref<4x512xf32, #tpu.memory_space<vmem>>, vector<4x256xf32>
    %cst_81 = arith.constant 0.000000e+00 : f32
    %110 = vector.shape_cast %24 : vector<1x256xi1> to vector<1x256xi1>
    %111 = vector.broadcast %110 : vector<1x256xi1> to vector<4x256xi1>
    %112 = vector.broadcast %cst_81 : f32 to vector<4x256xf32>
    %113 = arith.select %111, %109, %112 : vector<4x256xi1>, vector<4x256xf32>
    %c24_82 = arith.constant 24 : index
    %c0_83 = arith.constant 0 : index
    %114 = vector.load %arg8[%c24_82, %c0_83] : memref<36x256xf32, #tpu.memory_space<vmem>>, vector<4x256xf32>
    tpu.vector_store %arg8[%c24_82, %c0_83], %113 {strides = array<i32>} : memref<36x256xf32, #tpu.memory_space<vmem>>, vector<4x256xf32>,
    %c0_84 = arith.constant 0 : index
    %c144_85 = arith.constant 144 : index
    %115 = vector.load %arg7[%c0_84, %c144_85] : memref<4x512xf32, #tpu.memory_space<vmem>>, vector<4x256xf32>
    %c28_86 = arith.constant 28 : index
    %c0_87 = arith.constant 0 : index
    %116 = vector.load %arg8[%c28_86, %c0_87] : memref<36x256xf32, #tpu.memory_space<vmem>>, vector<4x256xf32>
    tpu.vector_store %arg8[%c28_86, %c0_87], %115 {strides = array<i32>} : memref<36x256xf32, #tpu.memory_space<vmem>>, vector<4x256xf32>,
    %c0_88 = arith.constant 0 : index
    %c145_89 = arith.constant 145 : index
    %117 = vector.load %arg7[%c0_88, %c145_89] : memref<4x512xf32, #tpu.memory_space<vmem>>, vector<4x256xf32>
    %cst_90 = arith.constant 0.000000e+00 : f32
    %118 = vector.shape_cast %26 : vector<1x256xi1> to vector<1x256xi1>
    %119 = vector.broadcast %118 : vector<1x256xi1> to vector<4x256xi1>
    %120 = vector.broadcast %cst_90 : f32 to vector<4x256xf32>
    %121 = arith.select %119, %117, %120 : vector<4x256xi1>, vector<4x256xf32>
    %c32_91 = arith.constant 32 : index
    %c0_92 = arith.constant 0 : index
    %122 = vector.load %arg8[%c32_91, %c0_92] : memref<36x256xf32, #tpu.memory_space<vmem>>, vector<4x256xf32>
    tpu.vector_store %arg8[%c32_91, %c0_92], %121 {strides = array<i32>} : memref<36x256xf32, #tpu.memory_space<vmem>>, vector<4x256xf32>,
    %c0_93 = arith.constant 0 : index
    %c0_94 = arith.constant 0 : index
    %123 = vector.load %arg8[%c0_93, %c0_94] : memref<36x256xf32, #tpu.memory_space<vmem>>, vector<36x256xf32>
    %cst_95 = arith.constant dense<0.000000e+00> : vector<4x256xf32>
    %124 = tpu.matmul %3, %123, %cst_95 {dimension_numbers = #tpu.dot_dimension_numbers<[1], [0], [0], [1], [0, 0, 1, 1], [], []>} : vector<4x36xf32>, vector<36x256xf32>, vector<4x256xf32> -> vector<4x256xf32>
    %125 = vector.broadcast %5 : vector<4x1xf32> to vector<4x256xf32>
    %126 = arith.addf %124, %125 : vector<4x256xf32>
    %127 = arith.addf %126, %1 : vector<4x256xf32>
    %cst_96 = arith.constant 0.000000e+00 : f32
    %128 = vector.broadcast %cst_96 : f32 to vector<4x256xf32>
    %129 = arith.maximumf %127, %128 : vector<4x256xf32>
    %c0_97 = arith.constant 0 : index
    %c0_98 = arith.constant 0 : index
    %c0_99 = arith.constant 0 : index
    %130 = vector.load %arg6[%c0_97, %c0_98, %c0_99] : memref<1x4x256xf32, #tpu.memory_space<vmem>>, vector<1x4x256xf32>
    %131 = vector.shape_cast %130 : vector<1x4x256xf32> to vector<4x256xf32>
    %132 = vector.shape_cast %129 : vector<4x256xf32> to vector<1x4x256xf32>
    tpu.vector_store %arg6[%c0_97, %c0_98, %c0_99], %132 {strides = array<i32>} : memref<1x4x256xf32, #tpu.memory_space<vmem>>, vector<1x4x256xf32>,
    return
  }
  func.func @transform_0(%arg0: i32) -> (i32, i32, i32) {
    %c0_i32 = arith.constant 0 : i32
    %c0_i32_0 = arith.constant 0 : i32
    %c0_i32_1 = arith.constant 0 : i32
    return %arg0, %c0_i32, %c0_i32_0 : i32, i32, i32
  }
  func.func @transform_1(%arg0: i32) -> (i32, i32) {
    %c0_i32 = arith.constant 0 : i32
    %c0_i32_0 = arith.constant 0 : i32
    %c0_i32_1 = arith.constant 0 : i32
    return %c0_i32, %c0_i32_0 : i32, i32
  }
  func.func @transform_2(%arg0: i32) -> (i32, i32) {
    %c0_i32 = arith.constant 0 : i32
    %c0_i32_0 = arith.constant 0 : i32
    %c0_i32_1 = arith.constant 0 : i32
    return %c0_i32, %c0_i32_0 : i32, i32
  }
  func.func @transform_3(%arg0: i32) -> (i32, i32) {
    %c0_i32 = arith.constant 0 : i32
    %c0_i32_0 = arith.constant 0 : i32
    %c0_i32_1 = arith.constant 0 : i32
    return %c0_i32, %c0_i32_0 : i32, i32
  }
  func.func @transform_4(%arg0: i32) -> (i32, i32) {
    %c0_i32 = arith.constant 0 : i32
    %c0_i32_0 = arith.constant 0 : i32
    %c0_i32_1 = arith.constant 0 : i32
    return %c0_i32, %c0_i32_0 : i32, i32
  }
  func.func @transform_5(%arg0: i32) -> (i32, i32, i32) {
    %c0_i32 = arith.constant 0 : i32
    %c0_i32_0 = arith.constant 0 : i32
    %c0_i32_1 = arith.constant 0 : i32
    return %arg0, %c0_i32, %c0_i32_0 : i32, i32, i32
  }
}

</mosaic_0001>

<llo_original>
// kernel: resblock_plain_pallas.1
$region0: #{resblock_plain_pallas.1}
  #allocation0 [shape = 'u32[]', space=smem, size = 0x4, offset = 0x4, fixed_abs, tag = 'smem constant byte address 0x4 - core index']
  #allocation1 [shape = 'u32[72,128]{1,0:T(1,128)}', space=vmem, size = 0x9000, scoped, tag = 'internal scratch']
  #allocation2 [shape = 'f32[4,512]{1,0:T(4,128)}', space=vmem, size = 0x2000, scoped, tag = 'scratch operand']
  #allocation3 [shape = 'f32[36,256]{1,0:T(8,128)}', space=vmem, size = 0xa000, scoped, tag = 'scratch operand']
  %s0 = inlined_call_operand.vmem [shape: f32[2,4,256], index: 0, kind: input, shape index: {}]
  %s1 = inlined_call_operand.vmem [shape: f32[4,36], index: 1, kind: input, shape index: {}]
  %s2 = inlined_call_operand.vmem [shape: f32[4,1], index: 2, kind: input, shape index: {}]
  %s3 = inlined_call_operand.vmem [shape: f32[4,36], index: 3, kind: input, shape index: {}]
  %s4 = inlined_call_operand.vmem [shape: f32[4,1], index: 4, kind: input, shape index: {}]
  %s5 = inlined_call_operand.vmem [shape: f32[2,4,256], index: 5, kind: output, shape index: {}]
  %s6 = sld [smem:[#allocation0]]
  $region53: #{resblock_plain_pallas.1} parent=0
    _
  %s8 = ssub.s32 1, %s6
  %s9 = scalar_select 0, %s8, %s6
  loop: start=0, step=1, limit=4
  $region2: #{resblock_plain_pallas.1} parent=0 // loop_pre_header
    _
  $region3: #{resblock_plain_pallas.1} parent=0 // loop_header
    %s11 = sphi 0, %s15
    %p12 = scmp.ge.s32.totalorder %s11, 4
    %s21 = sphi 0, %s23
    %s24 = sphi 0, %s21
    %s25 = sphi 0, %s24
    %s41 = sphi 0, %s25
    %s45 = sphi 0, %s45
    %s47 = sphi 0, %s45
    %s48 = sphi 0, %s47
    %s62 = sphi 0, %s48
    %s66 = sphi 0, %s66
    %s68 = sphi 0, %s66
    %s69 = sphi 0, %s68
    %s83 = sphi 0, %s69
    %s87 = sphi 0, %s87
    %s89 = sphi 0, %s87
    %s90 = sphi 0, %s89
    %s104 = sphi 0, %s90
    %s108 = sphi 0, %s108
    %s110 = sphi 0, %s108
    %s111 = sphi 0, %s110
    %s125 = sphi 0, %s111
    %s131 = sphi 0, %s133
    %s134 = sphi 0, %s131
    %s135 = sphi 0, %s134
    %s151 = sphi 0, %s135
  $region4: #{resblock_plain_pallas.1} parent=0 // loop_header_branch
    %14 = sbr.rel (%p12) target = $region8
  $region5: #{resblock_plain_pallas.1} parent=0 // loop_body
    %s16 = ssub.s32 %s11, 1
    %s17 = ssub.s32 %s11, 2
    %s18 = sadd.s32 %s11, 1
    %s19 = ssub.s32 %s11, %s18
    %p20 = scmp.eq.s32.totalorder %s19, 0
    %s22 = sadd.s32 %s21, 1
    %s23 = scalar_select %p20, %s21, %s22
    %p26 = pneg %p20
    %p27 = scmp.eq.s32.totalorder %s11, 1
    %p28 = por %p26, %p27
    %p29 = scmp.ne.s32.totalorder %s21, %s24
    %p30 = scmp.eq.s32.totalorder %s11, 0
    %p31 = por %p29, %p30
    %p32 = scmp.ne.s32.totalorder %s21, %s24
    %p33 = scmp.eq.s32.totalorder %s16, 1
    %p34 = por %p32, %p33
    %p35 = scmp.ne.s32.totalorder %s24, %s25
    %p36 = scmp.eq.s32.totalorder %s16, 0
    %p37 = por %p35, %p36
    %p38 = scmp.ne.s32.totalorder %s24, %s25
    %p39 = scmp.eq.s32.totalorder %s17, 1
    %p40 = por %p38, %p39
    %p42 = scmp.ne.s32.totalorder %s25, %s41
    %p43 = scmp.eq.s32.totalorder %s17, 0
    %p44 = por %p42, %p43
    %s46 = sadd.s32 %s45, 1
    %p49 = scmp.eq.s32.totalorder %s11, 1
    %p50 = scmp.ne.s32.totalorder %s45, %s47
    %p51 = scmp.eq.s32.totalorder %s11, 0
    %p52 = por %p50, %p51
    %p53 = scmp.ne.s32.totalorder %s45, %s47
    %p54 = scmp.eq.s32.totalorder %s16, 1
    %p55 = por %p53, %p54
    %p56 = scmp.ne.s32.totalorder %s47, %s48
    %p57 = scmp.eq.s32.totalorder %s16, 0
    %p58 = por %p56, %p57
    %p59 = scmp.ne.s32.totalorder %s47, %s48
    %p60 = scmp.eq.s32.totalorder %s17, 1
    %p61 = por %p59, %p60
    %p63 = scmp.ne.s32.totalorder %s48, %s62
    %p64 = scmp.eq.s32.totalorder %s17, 0
    %p65 = por %p63, %p64
    %s67 = sadd.s32 %s66, 1
    %p70 = scmp.eq.s32.totalorder %s11, 1
    %p71 = scmp.ne.s32.totalorder %s66, %s68
    %p72 = scmp.eq.s32.totalorder %s11, 0
    %p73 = por %p71, %p72
    %p74 = scmp.ne.s32.totalorder %s66, %s68
    %p75 = scmp.eq.s32.totalorder %s16, 1
    %p76 = por %p74, %p75
    %p77 = scmp.ne.s32.totalorder %s68, %s69
    %p78 = scmp.eq.s32.totalorder %s16, 0
    %p79 = por %p77, %p78
    %p80 = scmp.ne.s32.totalorder %s68, %s69
    %p81 = scmp.eq.s32.totalorder %s17, 1
    %p82 = por %p80, %p81
    %p84 = scmp.ne.s32.totalorder %s69, %s83
    %p85 = scmp.eq.s32.totalorder %s17, 0
    %p86 = por %p84, %p85
    %s88 = sadd.s32 %s87, 1
    %p91 = scmp.eq.s32.totalorder %s11, 1
    %p92 = scmp.ne.s32.totalorder %s87, %s89
    %p93 = scmp.eq.s32.totalorder %s11, 0
    %p94 = por %p92, %p93
    %p95 = scmp.ne.s32.totalorder %s87, %s89
    %p96 = scmp.eq.s32.totalorder %s16, 1
    %p97 = por %p95, %p96
    %p98 = scmp.ne.s32.totalorder %s89, %s90
    %p99 = scmp.eq.s32.totalorder %s16, 0
    %p100 = por %p98, %p99
    %p101 = scmp.ne.s32.totalorder %s89, %s90
    %p102 = scmp.eq.s32.totalorder %s17, 1
    %p103 = por %p101, %p102
    %p105 = scmp.ne.s32.totalorder %s90, %s104
    %p106 = scmp.eq.s32.totalorder %s17, 0
    %p107 = por %p105, %p106
    %s109 = sadd.s32 %s108, 1
    %p112 = scmp.eq.s32.totalorder %s11, 1
    %p113 = scmp.ne.s32.totalorder %s108, %s110
    %p114 = scmp.eq.s32.totalorder %s11, 0
    %p115 = por %p113, %p114
    %p116 = scmp.ne.s32.totalorder %s108, %s110
    %p117 = scmp.eq.s32.totalorder %s16, 1
    %p118 = por %p116, %p117
    %p119 = scmp.ne.s32.totalorder %s110, %s111
    %p120 = scmp.eq.s32.totalorder %s16, 0
    %p121 = por %p119, %p120
    %p122 = scmp.ne.s32.totalorder %s110, %s111
    %p123 = scmp.eq.s32.totalorder %s17, 1
    %p124 = por %p122, %p123
    %p126 = scmp.ne.s32.totalorder %s111, %s125
    %p127 = scmp.eq.s32.totalorder %s17, 0
    %p128 = por %p126, %p127
    %s129 = ssub.s32 %s11, %s18
    %p130 = scmp.eq.s32.totalorder %s129, 0
    %s132 = sadd.s32 %s131, 1
    %s133 = scalar_select %p130, %s131, %s132
    %p136 = pneg %p130
    %p137 = scmp.eq.s32.totalorder %s11, 1
    %p138 = por %p136, %p137
    %p139 = scmp.ne.s32.totalorder %s131, %s134
    %p140 = scmp.eq.s32.totalorder %s11, 0
    %p141 = por %p139, %p140
    %p142 = scmp.ne.s32.totalorder %s131, %s134
    %p143 = scmp.eq.s32.totalorder %s16, 1
    %p144 = por %p142, %p143
    %p145 = scmp.ne.s32.totalorder %s134, %s135
    %p146 = scmp.eq.s32.totalorder %s16, 0
    %p147 = por %p145, %p146
    %p148 = scmp.ne.s32.totalorder %s134, %s135
    %p149 = scmp.eq.s32.totalorder %s17, 1
    %p150 = por %p148, %p149
    %p152 = scmp.ne.s32.totalorder %s135, %s151
    %p153 = scmp.eq.s32.totalorder %s17, 0
    %p154 = por %p152, %p153
    %p155 = scmp.le.s32.totalorder 1, %s11
    %p156 = scmp.lt.s32.totalorder %s11, 3
    %p157 = pnand %p155, %p156
    %p158 = pneg %p157
    // Predicated region
    $region9: #{resblock_plain_pallas.1} parent=5 // pred_check
      _
    $region10: #{resblock_plain_pallas.1} parent=5 // pred_check_branch
      %160 = sbr.rel (%p157) target = $region12
    $region11: #{resblock_plain_pallas.1} parent=5 // pred_region
      %s161 = ssub.s32 %s11, 1
      // Predicated region
      $region13: #{resblock_plain_pallas.1} parent=11 // pred_check
        %p162 = pneg %p58
      $region14: #{resblock_plain_pallas.1} parent=11 // pred_check_branch
        %164 = sbr.rel (%p162) target = $region16
      $region15: #{resblock_plain_pallas.1} parent=11 // pred_region
        _
      $region16: #{resblock_plain_pallas.1} parent=11 // pred_fallthru
        _
      // Predicated region
      $region17: #{resblock_plain_pallas.1} parent=11 // pred_check
        %p165 = pneg %p79
      $region18: #{resblock_plain_pallas.1} parent=11 // pred_check_branch
        %167 = sbr.rel (%p165) target = $region20
      $region19: #{resblock_plain_pallas.1} parent=11 // pred_region
        _
      $region20: #{resblock_plain_pallas.1} parent=11 // pred_fallthru
        _
      // Predicated region
      $region21: #{resblock_plain_pallas.1} parent=11 // pred_check
        %p168 = pneg %p100
      $region22: #{resblock_plain_pallas.1} parent=11 // pred_check_branch
        %170 = sbr.rel (%p168) target = $region24
      $region23: #{resblock_plain_pallas.1} parent=11 // pred_region
        _
      $region24: #{resblock_plain_pallas.1} parent=11 // pred_fallthru
        _
      // Predicated region
      $region25: #{resblock_plain_pallas.1} parent=11 // pred_check
        %p171 = pneg %p121
      $region26: #{resblock_plain_pallas.1} parent=11 // pred_check_branch
        %173 = sbr.rel (%p171) target = $region28
      $region27: #{resblock_plain_pallas.1} parent=11 // pred_region
        _
      $region28: #{resblock_plain_pallas.1} parent=11 // pred_fallthru
        _
    $region12: #{resblock_plain_pallas.1} parent=5 // pred_fallthru
      _
    %p174 = scmp.lt.s32.totalorder %s11, 2
    // Predicated region
    $region29: #{resblock_plain_pallas.1} parent=5 // pred_check
      %p175 = pneg %p174
    $region30: #{resblock_plain_pallas.1} parent=5 // pred_check_branch
      %177 = sbr.rel (%p175) target = $region32
    $region31: #{resblock_plain_pallas.1} parent=5 // pred_region
      // Predicated region
      $region33: #{resblock_plain_pallas.1} parent=31 // pred_check
        %p178 = pneg %p31
      $region34: #{resblock_plain_pallas.1} parent=31 // pred_check_branch
        %180 = sbr.rel (%p178) target = $region36
      $region35: #{resblock_plain_pallas.1} parent=31 // pred_region
        %p181 = scmp.lt.s32.totalorder %s11, 1
        %s182 = scalar_select %p181, %s11, 1
        %s183 = smul.addr %s182, 2
        %s184 = smul.addr %s183, 4
        %s185 = scalar_lea.vmem %s0, %s184
      $region36: #{resblock_plain_pallas.1} parent=31 // pred_fallthru
        _
    $region32: #{resblock_plain_pallas.1} parent=5 // pred_fallthru
      _
    %p186 = scmp.le.s32.totalorder 1, %s11
    %p187 = scmp.lt.s32.totalorder %s11, 3
    %p188 = pnand %p186, %p187
    %p189 = pneg %p188
    // Predicated region
    $region37: #{resblock_plain_pallas.1} parent=5 // pred_check
      _
    $region38: #{resblock_plain_pallas.1} parent=5 // pred_check_branch
      %191 = sbr.rel (%p188) target = $region40
    $region39: #{resblock_plain_pallas.1} parent=5 // pred_region
      %s192 = ssub.s32 %s11, 1
      %p193 = scmp.lt.s32.totalorder %s16, 1
      %s194 = scalar_select %p193, %s16, 1
      %s195 = smul.addr %s194, 2
      %s196 = smul.addr %s195, 4
      %s197 = scalar_lea.vmem %s0, %s196
      %p198 = pneg %p37
      %p199 = pneg %p34
      %p200 = pneg %p58
      %p201 = pneg %p55
      %p202 = pneg %p79
      %p203 = pneg %p76
      %p204 = pneg %p100
      %p205 = pneg %p97
      %p206 = pneg %p121
      %p207 = pneg %p118
      %p208 = pneg %p147
      %p209 = pneg %p144
      %p210 = scmp.lt.s32.totalorder %s16, 1
      %s211 = scalar_select %p210, %s16, 1
      %s212 = smul.addr %s211, 2
      %s213 = smul.addr %s212, 4
      %s214 = scalar_lea.vmem %s5, %s213
      %p215 = scmp.lt.s32.totalorder %s16, 1
      %s216 = scalar_select %p215, %s16, 1
      %s217 = smul.addr %s216, 2
      %s218 = smul.addr %s217, 4
      %s219 = scalar_lea.vmem %s0, %s218
      %p220 = scmp.lt.s32.totalorder %s16, 1
      %s221 = scalar_select %p220, %s16, 1
      %s222 = smul.addr %s221, 2
      %s223 = smul.addr %s222, 4
      %s224 = scalar_lea.vmem %s5, %s223
      %v225 = vld [vmem:[%s219] sm:$0xff]
      %v226 = vld [vmem:[%s1] sm:$0xf]
      %v227 = vld [vmem:[%s3] sm:$0xf]
      %v228 = vld [vmem:[%s2] sm:$0xf]
      %v229 = vld [vmem:[%s4] sm:$0xf]
      %v230 = vlaneseq
      %v231 = vand.u32 %v230, 127
      %v232 = vadd.s32 %v231, 128
      %vm233 = vcmp.lt.s32.totalorder %v231, 0
      %v234 = vsub.s32 0, %v231
      %v235 = vsel %vm233, %v234, %v231
      %v236 = vshrl.u32 %v235, 4
      %v237 = vand.u32 %v235, 15
      %v238 = vsub.s32 0, %v237
      %v239 = vsel %vm233, %v238, %v237
      %vm240 = vcmp.lt.s32.totalorder %v232, 0
      %v241 = vsub.s32 0, %v232
      %v242 = vsel %vm240, %v241, %v232
      %v243 = vshrl.u32 %v242, 4
      %v244 = vand.u32 %v242, 15
      %v245 = vsub.s32 0, %v244
      %v246 = vsel %vm240, %v245, %v244
      %vm247 = vcmp.ne.s32.totalorder %v239, 0
      %vm248 = vcmp.ne.s32.totalorder %v246, 0
      %vm249 = vcmp.lt.s32.totalorder %v239, 0
      %vm250 = vcmp.lt.s32.totalorder %v246, 0
      %vm251 = vmand %vm249, %vm247
      %vm252 = vmand %vm250, %vm248
      %v253 = vadd.s32 %v239, 16
      %v254 = vadd.s32 %v246, 16
      %v255 = vsel %vm251, %v253, %v239
      %v256 = vsel %vm252, %v254, %v246
      %vm257 = vcmp.gt.s32.totalorder %v255, 0
      %vm258 = vcmp.gt.s32.totalorder %v256, 0
      %vm259 = vcmp.lt.s32.totalorder %v255, 15
      %vm260 = vcmp.lt.s32.totalorder %v256, 15
      %261 = vst [vmem:[#allocation2] sm:$0xf] 0.0
      %262 = vst [vmem:[#allocation2 + $0xc] sm:$0xf] 0.0
      %263 = vst [vmem:[#allocation2 + $0x4] sm:$0xff] %v225
      %v264 = vld [vmem:[#allocation2] sm:$0xff]
      %v265 = vld [vmem:[#allocation2 + $0x8] sm:$0xf]
      %v266 = vsel %vm257, 1, 0
      %v267 = vsel %vm258, 1, 0
      %vm268 = vcmp.eq.s32.totalorder %v266, 1
      %vm269 = vcmp.eq.s32.totalorder %v267, 1
      %272 = vst [vmem:[#allocation1] ss:$2 sm:$0xff] %v264
      %s273 = scalar_lea.vmem [#allocation1], 16
      %274 = vst [vmem:[%s273] ss:$2 sm:$0xff] %v265
      %v275 = vld.sshfl [vmem:[#allocation1] sm:$0xff pattern:$0x75316420]
      %v276 = vld.sshfl [vmem:[#allocation1 + $0x8] sm:$0xff pattern:$0x75316420]
      %v277 = vld.sshfl [vmem:[#allocation1 + $0x10] sm:$0xff pattern:$0x75316420]
      %278 = vrot.lane.b32.xlu0 %v275, 17
      %v279 = vpop.permute.xlu0 %278
      %280 = vrot.lane.b32.xlu0 %v276, 17
      %v281 = vpop.permute.xlu0 %280
      %282 = vrot.lane.b32.xlu0 %v277, 17
      %v283 = vpop.permute.xlu0 %282
      %vm284 = vcmask 138240
      %v285 = vsel %vm284, %v279, %v281
      %v286 = vsel %vm284, %v281, %v283
      %v289 = vsel %vm268, %v285, 0.0
      %v290 = vsel %vm269, %v286, 0.0
      %291 = vst [vmem:[#allocation3] sm:$0xf] %v289
      %292 = vst [vmem:[#allocation3 + $0x8] sm:$0xf] %v290
      %v293 = vld [vmem:[#allocation2] sm:$0xff]
      %v294 = vld [vmem:[#allocation2 + $0x8] sm:$0xf]
      %s297 = scalar_lea.vmem [#allocation1], 1
      %298 = vst [vmem:[%s297] ss:$2 sm:$0xff] %v293
      %s299 = scalar_lea.vmem [#allocation1], 17
      %300 = vst [vmem:[%s299] ss:$2 sm:$0xff] %v294
      %v301 = vld.sshfl [vmem:[#allocation1] sm:$0xff pattern:$0x75316420]
      %v302 = vld.sshfl [vmem:[#allocation1 + $0x8] sm:$0xff pattern:$0x75316420]
      %v303 = vld.sshfl [vmem:[#allocation1 + $0x10] sm:$0xff pattern:$0x75316420]
      %304 = vrot.lane.b32.xlu0 %v301, 16
      %v305 = vpop.permute.xlu0 %304
      %306 = vrot.lane.b32.xlu0 %v302, 16
      %v307 = vpop.permute.xlu0 %306
      %308 = vrot.lane.b32.xlu0 %v303, 16
      %v309 = vpop.permute.xlu0 %308
      %vm310 = vcmask 130048
      %v311 = vsel %vm310, %v305, %v307
      %v312 = vsel %vm310, %v307, %v309
      %315 = vst [vmem:[#allocation3] sm:$0xf0] %v311
      %316 = vst [vmem:[#allocation3 + $0x8] sm:$0xf0] %v312
      %v317 = vld [vmem:[#allocation2] sm:$0xff]
      %v318 = vld [vmem:[#allocation2 + $0x8] sm:$0xf]
      %v319 = vsel %vm259, 1, 0
      %v320 = vsel %vm260, 1, 0
      %vm321 = vcmp.eq.s32.totalorder %v319, 1
      %vm322 = vcmp.eq.s32.totalorder %v320, 1
      %325 = vst [vmem:[#allocation1] ss:$2 sm:$0xff] %v317
      %s326 = scalar_lea.vmem [#allocation1], 16
      %327 = vst [vmem:[%s326] ss:$2 sm:$0xff] %v318
      %v328 = vld.sshfl [vmem:[#allocation1] sm:$0xff pattern:$0x75316420]
      %v329 = vld.sshfl [vmem:[#allocation1 + $0x8] sm:$0xff pattern:$0x75316420]
      %v330 = vld.sshfl [vmem:[#allocation1 + $0x10] sm:$0xff pattern:$0x75316420]
      %331 = vrot.lane.b32.xlu0 %v328, 15
      %v332 = vpop.permute.xlu0 %331
      %333 = vrot.lane.b32.xlu0 %v329, 15
      %v334 = vpop.permute.xlu0 %333
      %335 = vrot.lane.b32.xlu0 %v330, 15
      %v336 = vpop.permute.xlu0 %335
      %vm337 = vcmask 121856
      %v338 = vsel %vm337, %v332, %v334
      %v339 = vsel %vm337, %v334, %v336
      %v342 = vsel %vm321, %v338, 0.0
      %v343 = vsel %vm322, %v339, 0.0
      %344 = vst [vmem:[#allocation3 + $0x10] sm:$0xf] %v342
      %345 = vst [vmem:[#allocation3 + $0x18] sm:$0xf] %v343
      %v346 = vld [vmem:[#allocation2] sm:$0xff]
      %v347 = vld [vmem:[#allocation2 + $0x8] sm:$0xf]
      %350 = vst [vmem:[#allocation1] ss:$2 sm:$0xff] %v346
      %s351 = scalar_lea.vmem [#allocation1], 16
      %352 = vst [vmem:[%s351] ss:$2 sm:$0xff] %v347
      %v353 = vld.sshfl [vmem:[#allocation1] sm:$0xff pattern:$0x75316420]
      %v354 = vld.sshfl [vmem:[#allocation1 + $0x8] sm:$0xff pattern:$0x75316420]
      %v355 = vld.sshfl [vmem:[#allocation1 + $0x10] sm:$0xff pattern:$0x75316420]
      %356 = vrot.lane.b32.xlu0 %v353, 1
      %v357 = vpop.permute.xlu0 %356
      %358 = vrot.lane.b32.xlu0 %v354, 1
      %v359 = vpop.permute.xlu0 %358
      %360 = vrot.lane.b32.xlu0 %v355, 1
      %v361 = vpop.permute.xlu0 %360
      %vm362 = vcmask 7168
      %v363 = vsel %vm362, %v357, %v359
      %v364 = vsel %vm362, %v359, %v361
      %v367 = vsel %vm268, %v363, 0.0
      %v368 = vsel %vm269, %v364, 0.0
      %v371 = vrot.slane %v367, 4
      %v372 = vrot.slane %v368, 4
      %375 = vst [vmem:[#allocation3 + $0x10] sm:$0xf0] %v371
      %376 = vst [vmem:[#allocation3 + $0x18] sm:$0xf0] %v372
      %v377 = vld [vmem:[#allocation2 + $0x4] sm:$0xff]
      %379 = vst [vmem:[#allocation1] ss:$2 sm:$0xff] %v377
      %v380 = vld.sshfl [vmem:[#allocation1] sm:$0xff pattern:$0x75316420]
      %v381 = vld.sshfl [vmem:[#allocation1 + $0x8] sm:$0xff pattern:$0x75316420]
      %384 = vst [vmem:[#allocation3 + $0x20] sm:$0xf] %v380
      %385 = vst [vmem:[#allocation3 + $0x28] sm:$0xf] %v381
      %v386 = vld [vmem:[#allocation2 + $0x4] sm:$0xff]
      %v387 = vld [vmem:[#allocation2 + $0xc] sm:$0xf]
      %390 = vst [vmem:[#allocation1] ss:$2 sm:$0xff] %v386
      %s391 = scalar_lea.vmem [#allocation1], 16
      %392 = vst [vmem:[%s391] ss:$2 sm:$0xff] %v387
      %v393 = vld.sshfl [vmem:[#allocation1] sm:$0xff pattern:$0x75316420]
      %v394 = vld.sshfl [vmem:[#allocation1 + $0x8] sm:$0xff pattern:$0x75316420]
      %v395 = vld.sshfl [vmem:[#allocation1 + $0x10] sm:$0xff pattern:$0x75316420]
      %396 = vrot.lane.b32.xlu0 %v393, 127
      %v397 = vpop.permute.xlu0 %396
      %398 = vrot.lane.b32.xlu0 %v394, 127
      %v399 = vpop.permute.xlu0 %398
      %400 = vrot.lane.b32.xlu0 %v395, 127
      %v401 = vpop.permute.xlu0 %400
      %vm402 = vcmask 1039360
      %v403 = vsel %vm402, %v397, %v399
      %v404 = vsel %vm402, %v399, %v401
      %v407 = vsel %vm321, %v403, 0.0
      %v408 = vsel %vm322, %v404, 0.0
      %v411 = vrot.slane %v407, 4
      %v412 = vrot.slane %v408, 4
      %415 = vst [vmem:[#allocation3 + $0x20] sm:$0xf0] %v411
      %416 = vst [vmem:[#allocation3 + $0x28] sm:$0xf0] %v412
      %v417 = vld [vmem:[#allocation2 + $0x4] sm:$0xff]
      %v418 = vld [vmem:[#allocation2 + $0xc] sm:$0xf]
      %421 = vst [vmem:[#allocation1] ss:$2 sm:$0xff] %v417
      %s422 = scalar_lea.vmem [#allocation1], 16
      %423 = vst [vmem:[%s422] ss:$2 sm:$0xff] %v418
      %v424 = vld.sshfl [vmem:[#allocation1] sm:$0xff pattern:$0x75316420]
      %v425 = vld.sshfl [vmem:[#allocation1 + $0x8] sm:$0xff pattern:$0x75316420]
      %v426 = vld.sshfl [vmem:[#allocation1 + $0x10] sm:$0xff pattern:$0x75316420]
      %427 = vrot.lane.b32.xlu0 %v424, 113
      %v428 = vpop.permute.xlu0 %427
      %429 = vrot.lane.b32.xlu0 %v425, 113
      %v430 = vpop.permute.xlu0 %429
      %431 = vrot.lane.b32.xlu0 %v426, 113
      %v432 = vpop.permute.xlu0 %431
      %vm433 = vcmask 924672
      %v434 = vsel %vm433, %v428, %v430
      %v435 = vsel %vm433, %v430, %v432
      %v438 = vsel %vm268, %v434, 0.0
      %v439 = vsel %vm269, %v435, 0.0
      %440 = vst [vmem:[#allocation3 + $0x30] sm:$0xf] %v438
      %441 = vst [vmem:[#allocation3 + $0x38] sm:$0xf] %v439
      %v442 = vld [vmem:[#allocation2 + $0x4] sm:$0xff]
      %v443 = vld [vmem:[#allocation2 + $0xc] sm:$0xf]
      %s446 = scalar_lea.vmem [#allocation1], 1
      %447 = vst [vmem:[%s446] ss:$2 sm:$0xff] %v442
      %s448 = scalar_lea.vmem [#allocation1], 17
      %449 = vst [vmem:[%s448] ss:$2 sm:$0xff] %v443
      %v450 = vld.sshfl [vmem:[#allocation1] sm:$0xff pattern:$0x75316420]
      %v451 = vld.sshfl [vmem:[#allocation1 + $0x8] sm:$0xff pattern:$0x75316420]
      %v452 = vld.sshfl [vmem:[#allocation1 + $0x10] sm:$0xff pattern:$0x75316420]
      %453 = vrot.lane.b32.xlu0 %v450, 112
      %v454 = vpop.permute.xlu0 %453
      %455 = vrot.lane.b32.xlu0 %v451, 112
      %v456 = vpop.permute.xlu0 %455
      %457 = vrot.lane.b32.xlu0 %v452, 112
      %v458 = vpop.permute.xlu0 %457
      %vm459 = vcmask 916480
      %v460 = vsel %vm459, %v454, %v456
      %v461 = vsel %vm459, %v456, %v458
      %464 = vst [vmem:[#allocation3 + $0x30] sm:$0xf0] %v460
      %465 = vst [vmem:[#allocation3 + $0x38] sm:$0xf0] %v461
      %v466 = vld [vmem:[#allocation2 + $0x4] sm:$0xff]
      %v467 = vld [vmem:[#allocation2 + $0xc] sm:$0xf]
      %470 = vst [vmem:[#allocation1] ss:$2 sm:$0xff] %v466
      %s471 = scalar_lea.vmem [#allocation1], 16
      %472 = vst [vmem:[%s471] ss:$2 sm:$0xff] %v467
      %v473 = vld.sshfl [vmem:[#allocation1] sm:$0xff pattern:$0x75316420]
      %v474 = vld.sshfl [vmem:[#allocation1 + $0x8] sm:$0xff pattern:$0x75316420]
      %v475 = vld.sshfl [vmem:[#allocation1 + $0x10] sm:$0xff pattern:$0x75316420]
      %476 = vrot.lane.b32.xlu0 %v473, 111
      %v477 = vpop.permute.xlu0 %476
      %478 = vrot.lane.b32.xlu0 %v474, 111
      %v479 = vpop.permute.xlu0 %478
      %480 = vrot.lane.b32.xlu0 %v475, 111
      %v481 = vpop.permute.xlu0 %480
      %vm482 = vcmask 908288
      %v483 = vsel %vm482, %v477, %v479
      %v484 = vsel %vm482, %v479, %v481
      %v487 = vsel %vm321, %v483, 0.0
      %v488 = vsel %vm322, %v484, 0.0
      %489 = vst [vmem:[#allocation3 + $0x40] sm:$0xf] %v487
      %490 = vst [vmem:[#allocation3 + $0x48] sm:$0xf] %v488
      %v491 = vld [vmem:[#allocation3] sm:$0xff]
      %v492 = vld [vmem:[#allocation3 + $0x8] sm:$0xff]
      %v493 = vld [vmem:[#allocation3 + $0x10] sm:$0xff]
      %v494 = vld [vmem:[#allocation3 + $0x18] sm:$0xff]
      %v495 = vld [vmem:[#allocation3 + $0x20] sm:$0xff]
      %v496 = vld [vmem:[#allocation3 + $0x28] sm:$0xff]
      %v497 = vld [vmem:[#allocation3 + $0x30] sm:$0xff]
      %v498 = vld [vmem:[#allocation3 + $0x38] sm:$0xff]
      %v499 = vld [vmem:[#allocation3 + $0x40] sm:$0xf]
      %v500 = vld [vmem:[#allocation3 + $0x48] sm:$0xf]
      %502 = vset.pattern.permute.xlu0 0
      %503 = vperm.xlu0 %502, %v228
      %v504 = vpop.permute.xlu0 %503
      %vm506 = vcmask 293888
      %v508 = vsel %vm506, %v226, 0
      %vm510 = vcmask 1043456
      %v512 = vsel %vm510, %v499, 0
      %v515 = vsel %vm510, %v500, 0
      %517 = vmatpush.msra.mxu0 0.0
      %518 = vmatpush.msra.mxu0 0.0
      %519 = vmatpush.msra.mxu0 0.0
      %520 = vmatpush.msra.mxu0 0.0
      %521 = vmatpush.msra.mxu0 0.0
      %522 = vmatpush.msra.mxu0 0.0
      %523 = vmatpush.msra.mxu0 0.0
      %524 = vmatpush.msra.mxu0 0.0
      %525 = vmatpush.msra.mxu0 0.0
      %526 = vmatpush.msra.mxu0 0.0
      %527 = vmatpush.msra.mxu0 0.0
      %528 = vmatpush.msra.mxu0 %v512
      %529 = vmatpush.msra.mxu0 %v497
      %530 = vmatpush.msra.mxu0 %v495
      %531 = vmatpush.msra.mxu0 %v493
      %532 = vmatpush.msra.mxu0 %v491
      %533 = vmatmul.f32.gmra.mxu0 %v508
      %v534 = vpop.f32.mrf.mxu0
      %v535 = vadd.f32 %v504, %v534
      %536 = vdwg.mxu0
      %537 = vmatpush.msra.mxu0 0.0
      %538 = vmatpush.msra.mxu0 0.0
      %539 = vmatpush.msra.mxu0 0.0
      %540 = vmatpush.msra.mxu0 0.0
      %541 = vmatpush.msra.mxu0 0.0
      %542 = vmatpush.msra.mxu0 0.0
      %543 = vmatpush.msra.mxu0 0.0
      %544 = vmatpush.msra.mxu0 0.0
      %545 = vmatpush.msra.mxu0 0.0
      %546 = vmatpush.msra.mxu0 0.0
      %547 = vmatpush.msra.mxu0 0.0
      %548 = vmatpush.msra.mxu0 %v515
      %549 = vmatpush.msra.mxu0 %v498
      %550 = vmatpush.msra.mxu0 %v496
      %551 = vmatpush.msra.mxu0 %v494
      %552 = vmatpush.msra.mxu0 %v492
      %553 = vmatmul.f32.gmra.mxu0 %v508
      %v554 = vpop.f32.mrf.mxu0
      %v555 = vadd.f32 %v504, %v554
      %556 = vdwg.mxu0
      %v557 = vmax.f32 %v535, 0.0
      %v558 = vmax.f32 %v555, 0.0
      %v561 = vrot.slane %v558, 4
      %v562 = vsel %vm510, %v557, %v561
      %564 = vst [vmem:[#allocation2 + $0x4] sm:$0xff] %v562
      %v565 = vld [vmem:[#allocation2] sm:$0xff]
      %v566 = vld [vmem:[#allocation2 + $0x8] sm:$0xf]
      %569 = vst [vmem:[#allocation1] ss:$2 sm:$0xff] %v565
      %s570 = scalar_lea.vmem [#allocation1], 16
      %571 = vst [vmem:[%s570] ss:$2 sm:$0xff] %v566
      %v572 = vld.sshfl [vmem:[#allocation1] sm:$0xff pattern:$0x75316420]
      %v573 = vld.sshfl [vmem:[#allocation1 + $0x8] sm:$0xff pattern:$0x75316420]
      %v574 = vld.sshfl [vmem:[#allocation1 + $0x10] sm:$0xff pattern:$0x75316420]
      %575 = vrot.lane.b32.xlu0 %v572, 17
      %v576 = vpop.permute.xlu0 %575
      %577 = vrot.lane.b32.xlu0 %v573, 17
      %v578 = vpop.permute.xlu0 %577
      %579 = vrot.lane.b32.xlu0 %v574, 17
      %v580 = vpop.permute.xlu0 %579
      %v581 = vsel %vm284, %v576, %v578
      %v582 = vsel %vm284, %v578, %v580
      %v585 = vsel %vm268, %v581, 0.0
      %v586 = vsel %vm269, %v582, 0.0
      %587 = vst [vmem:[#allocation3] sm:$0xf] %v585
      %588 = vst [vmem:[#allocation3 + $0x8] sm:$0xf] %v586
      %v589 = vld [vmem:[#allocation2] sm:$0xff]
      %v590 = vld [vmem:[#allocation2 + $0x8] sm:$0xf]
      %s593 = scalar_lea.vmem [#allocation1], 1
      %594 = vst [vmem:[%s593] ss:$2 sm:$0xff] %v589
      %s595 = scalar_lea.vmem [#allocation1], 17
      %596 = vst [vmem:[%s595] ss:$2 sm:$0xff] %v590
      %v597 = vld.sshfl [vmem:[#allocation1] sm:$0xff pattern:$0x75316420]
      %v598 = vld.sshfl [vmem:[#allocation1 + $0x8] sm:$0xff pattern:$0x75316420]
      %v599 = vld.sshfl [vmem:[#allocation1 + $0x10] sm:$0xff pattern:$0x75316420]
      %600 = vrot.lane.b32.xlu0 %v597, 16
      %v601 = vpop.permute.xlu0 %600
      %602 = vrot.lane.b32.xlu0 %v598, 16
      %v603 = vpop.permute.xlu0 %602
      %604 = vrot.lane.b32.xlu0 %v599, 16
      %v605 = vpop.permute.xlu0 %604
      %v606 = vsel %vm310, %v601, %v603
      %v607 = vsel %vm310, %v603, %v605
      %610 = vst [vmem:[#allocation3] sm:$0xf0] %v606
      %611 = vst [vmem:[#allocation3 + $0x8] sm:$0xf0] %v607
      %v612 = vld [vmem:[#allocation2] sm:$0xff]
      %v613 = vld [vmem:[#allocation2 + $0x8] sm:$0xf]
      %616 = vst [vmem:[#allocation1] ss:$2 sm:$0xff] %v612
      %s617 = scalar_lea.vmem [#allocation1], 16
      %618 = vst [vmem:[%s617] ss:$2 sm:$0xff] %v613
      %v619 = vld.sshfl [vmem:[#allocation1] sm:$0xff pattern:$0x75316420]
      %v620 = vld.sshfl [vmem:[#allocation1 + $0x8] sm:$0xff pattern:$0x75316420]
      %v621 = vld.sshfl [vmem:[#allocation1 + $0x10] sm:$0xff pattern:$0x75316420]
      %622 = vrot.lane.b32.xlu0 %v619, 15
      %v623 = vpop.permute.xlu0 %622
      %624 = vrot.lane.b32.xlu0 %v620, 15
      %v625 = vpop.permute.xlu0 %624
      %626 = vrot.lane.b32.xlu0 %v621, 15
      %v627 = vpop.permute.xlu0 %626
      %v628 = vsel %vm337, %v623, %v625
      %v629 = vsel %vm337, %v625, %v627
      %v632 = vsel %vm321, %v628, 0.0
      %v633 = vsel %vm322, %v629, 0.0
      %634 = vst [vmem:[#allocation3 + $0x10] sm:$0xf] %v632
      %635 = vst [vmem:[#allocation3 + $0x18] sm:$0xf] %v633
      %v636 = vld [vmem:[#allocation2] sm:$0xff]
      %v637 = vld [vmem:[#allocation2 + $0x8] sm:$0xf]
      %640 = vst [vmem:[#allocation1] ss:$2 sm:$0xff] %v636
      %s641 = scalar_lea.vmem [#allocation1], 16
      %642 = vst [vmem:[%s641] ss:$2 sm:$0xff] %v637
      %v643 = vld.sshfl [vmem:[#allocation1] sm:$0xff pattern:$0x75316420]
      %v644 = vld.sshfl [vmem:[#allocation1 + $0x8] sm:$0xff pattern:$0x75316420]
      %v645 = vld.sshfl [vmem:[#allocation1 + $0x10] sm:$0xff pattern:$0x75316420]
      %646 = vrot.lane.b32.xlu0 %v643, 1
      %v647 = vpop.permute.xlu0 %646
      %648 = vrot.lane.b32.xlu0 %v644, 1
      %v649 = vpop.permute.xlu0 %648
      %650 = vrot.lane.b32.xlu0 %v645, 1
      %v651 = vpop.permute.xlu0 %650
      %v652 = vsel %vm362, %v647, %v649
      %v653 = vsel %vm362, %v649, %v651
      %v656 = vsel %vm268, %v652, 0.0
      %v657 = vsel %vm269, %v653, 0.0
      %v660 = vrot.slane %v656, 4
      %v661 = vrot.slane %v657, 4
      %664 = vst [vmem:[#allocation3 + $0x10] sm:$0xf0] %v660
      %665 = vst [vmem:[#allocation3 + $0x18] sm:$0xf0] %v661
      %v666 = vld [vmem:[#allocation2 + $0x4] sm:$0xff]
      %668 = vst [vmem:[#allocation1] ss:$2 sm:$0xff] %v666
      %v669 = vld.sshfl [vmem:[#allocation1] sm:$0xff pattern:$0x75316420]
      %v670 = vld.sshfl [vmem:[#allocation1 + $0x8] sm:$0xff pattern:$0x75316420]
      %673 = vst [vmem:[#allocation3 + $0x20] sm:$0xf] %v669
      %674 = vst [vmem:[#allocation3 + $0x28] sm:$0xf] %v670
      %v675 = vld [vmem:[#allocation2 + $0x4] sm:$0xff]
      %v676 = vld [vmem:[#allocation2 + $0xc] sm:$0xf]
      %679 = vst [vmem:[#allocation1] ss:$2 sm:$0xff] %v675
      %s680 = scalar_lea.vmem [#allocation1], 16
      %681 = vst [vmem:[%s680] ss:$2 sm:$0xff] %v676
      %v682 = vld.sshfl [vmem:[#allocation1] sm:$0xff pattern:$0x75316420]
      %v683 = vld.sshfl [vmem:[#allocation1 + $0x8] sm:$0xff pattern:$0x75316420]
      %v684 = vld.sshfl [vmem:[#allocation1 + $0x10] sm:$0xff pattern:$0x75316420]
      %685 = vrot.lane.b32.xlu0 %v682, 127
      %v686 = vpop.permute.xlu0 %685
      %687 = vrot.lane.b32.xlu0 %v683, 127
      %v688 = vpop.permute.xlu0 %687
      %689 = vrot.lane.b32.xlu0 %v684, 127
      %v690 = vpop.permute.xlu0 %689
      %v691 = vsel %vm402, %v686, %v688
      %v692 = vsel %vm402, %v688, %v690
      %v695 = vsel %vm321, %v691, 0.0
      %v696 = vsel %vm322, %v692, 0.0
      %v699 = vrot.slane %v695, 4
      %v700 = vrot.slane %v696, 4
      %703 = vst [vmem:[#allocation3 + $0x20] sm:$0xf0] %v699
      %704 = vst [vmem:[#allocation3 + $0x28] sm:$0xf0] %v700
      %v705 = vld [vmem:[#allocation2 + $0x4] sm:$0xff]
      %v706 = vld [vmem:[#allocation2 + $0xc] sm:$0xf]
      %709 = vst [vmem:[#allocation1] ss:$2 sm:$0xff] %v705
      %s710 = scalar_lea.vmem [#allocation1], 16
      %711 = vst [vmem:[%s710] ss:$2 sm:$0xff] %v706
      %v712 = vld.sshfl [vmem:[#allocation1] sm:$0xff pattern:$0x75316420]
      %v713 = vld.sshfl [vmem:[#allocation1 + $0x8] sm:$0xff pattern:$0x75316420]
      %v714 = vld.sshfl [vmem:[#allocation1 + $0x10] sm:$0xff pattern:$0x75316420]
      %715 = vrot.lane.b32.xlu0 %v712, 113
      %v716 = vpop.permute.xlu0 %715
      %717 = vrot.lane.b32.xlu0 %v713, 113
      %v718 = vpop.permute.xlu0 %717
      %719 = vrot.lane.b32.xlu0 %v714, 113
      %v720 = vpop.permute.xlu0 %719
      %v721 = vsel %vm433, %v716, %v718
      %v722 = vsel %vm433, %v718, %v720
      %v725 = vsel %vm268, %v721, 0.0
      %v726 = vsel %vm269, %v722, 0.0
      %727 = vst [vmem:[#allocation3 + $0x30] sm:$0xf] %v725
      %728 = vst [vmem:[#allocation3 + $0x38] sm:$0xf] %v726
      %v729 = vld [vmem:[#allocation2 + $0x4] sm:$0xff]
      %v730 = vld [vmem:[#allocation2 + $0xc] sm:$0xf]
      %s733 = scalar_lea.vmem [#allocation1], 1
      %734 = vst [vmem:[%s733] ss:$2 sm:$0xff] %v729
      %s735 = scalar_lea.vmem [#allocation1], 17
      %736 = vst [vmem:[%s735] ss:$2 sm:$0xff] %v730
      %v737 = vld.sshfl [vmem:[#allocation1] sm:$0xff pattern:$0x75316420]
      %v738 = vld.sshfl [vmem:[#allocation1 + $0x8] sm:$0xff pattern:$0x75316420]
      %v739 = vld.sshfl [vmem:[#allocation1 + $0x10] sm:$0xff pattern:$0x75316420]
      %740 = vrot.lane.b32.xlu0 %v737, 112
      %v741 = vpop.permute.xlu0 %740
      %742 = vrot.lane.b32.xlu0 %v738, 112
      %v743 = vpop.permute.xlu0 %742
      %744 = vrot.lane.b32.xlu0 %v739, 112
      %v745 = vpop.permute.xlu0 %744
      %v746 = vsel %vm459, %v741, %v743
      %v747 = vsel %vm459, %v743, %v745
      %750 = vst [vmem:[#allocation3 + $0x30] sm:$0xf0] %v746
      %751 = vst [vmem:[#allocation3 + $0x38] sm:$0xf0] %v747
      %v752 = vld [vmem:[#allocation2 + $0x4] sm:$0xff]
      %v753 = vld [vmem:[#allocation2 + $0xc] sm:$0xf]
      %756 = vst [vmem:[#allocation1] ss:$2 sm:$0xff] %v752
      %s757 = scalar_lea.vmem [#allocation1], 16
      %758 = vst [vmem:[%s757] ss:$2 sm:$0xff] %v753
      %v759 = vld.sshfl [vmem:[#allocation1] sm:$0xff pattern:$0x75316420]
      %v760 = vld.sshfl [vmem:[#allocation1 + $0x8] sm:$0xff pattern:$0x75316420]
      %v761 = vld.sshfl [vmem:[#allocation1 + $0x10] sm:$0xff pattern:$0x75316420]
      %762 = vrot.lane.b32.xlu0 %v759, 111
      %v763 = vpop.permute.xlu0 %762
      %764 = vrot.lane.b32.xlu0 %v760, 111
      %v765 = vpop.permute.xlu0 %764
      %766 = vrot.lane.b32.xlu0 %v761, 111
      %v767 = vpop.permute.xlu0 %766
      %v768 = vsel %vm482, %v763, %v765
      %v769 = vsel %vm482, %v765, %v767
      %v772 = vsel %vm321, %v768, 0.0
      %v773 = vsel %vm322, %v769, 0.0
      %774 = vst [vmem:[#allocation3 + $0x40] sm:$0xf] %v772
      %775 = vst [vmem:[#allocation3 + $0x48] sm:$0xf] %v773
      %v776 = vld [vmem:[#allocation3] sm:$0xff]
      %v777 = vld [vmem:[#allocation3 + $0x8] sm:$0xff]
      %v778 = vld [vmem:[#allocation3 + $0x10] sm:$0xff]
      %v779 = vld [vmem:[#allocation3 + $0x18] sm:$0xff]
      %v780 = vld [vmem:[#allocation3 + $0x20] sm:$0xff]
      %v781 = vld [vmem:[#allocation3 + $0x28] sm:$0xff]
      %v782 = vld [vmem:[#allocation3 + $0x30] sm:$0xff]
      %v783 = vld [vmem:[#allocation3 + $0x38] sm:$0xff]
      %v784 = vld [vmem:[#allocation3 + $0x40] sm:$0xf]
      %v785 = vld [vmem:[#allocation3 + $0x48] sm:$0xf]
      %787 = vset.pattern.permute.xlu0 0
      %788 = vperm.xlu0 %787, %v229
      %v789 = vpop.permute.xlu0 %788
      %v792 = vsel %vm506, %v227, 0
      %v795 = vsel %vm510, %v784, 0
      %v798 = vsel %vm510, %v785, 0
      %800 = vmatpush.msra.mxu0 0.0
      %801 = vmatpush.msra.mxu0 0.0
      %802 = vmatpush.msra.mxu0 0.0
      %803 = vmatpush.msra.mxu0 0.0
      %804 = vmatpush.msra.mxu0 0.0
      %805 = vmatpush.msra.mxu0 0.0
      %806 = vmatpush.msra.mxu0 0.0
      %807 = vmatpush.msra.mxu0 0.0
      %808 = vmatpush.msra.mxu0 0.0
      %809 = vmatpush.msra.mxu0 0.0
      %810 = vmatpush.msra.mxu0 0.0
      %811 = vmatpush.msra.mxu0 %v795
      %812 = vmatpush.msra.mxu0 %v782
      %813 = vmatpush.msra.mxu0 %v780
      %814 = vmatpush.msra.mxu0 %v778
      %815 = vmatpush.msra.mxu0 %v776
      %816 = vmatmul.f32.gmra.mxu0 %v792
      %v817 = vpop.f32.mrf.mxu0
      %v818 = vadd.f32 %v789, %v817
      %819 = vdwg.mxu0
      %820 = vmatpush.msra.mxu0 0.0
      %821 = vmatpush.msra.mxu0 0.0
      %822 = vmatpush.msra.mxu0 0.0
      %823 = vmatpush.msra.mxu0 0.0
      %824 = vmatpush.msra.mxu0 0.0
      %825 = vmatpush.msra.mxu0 0.0
      %826 = vmatpush.msra.mxu0 0.0
      %827 = vmatpush.msra.mxu0 0.0
      %828 = vmatpush.msra.mxu0 0.0
      %829 = vmatpush.msra.mxu0 0.0
      %830 = vmatpush.msra.mxu0 0.0
      %831 = vmatpush.msra.mxu0 %v798
      %832 = vmatpush.msra.mxu0 %v783
      %833 = vmatpush.msra.mxu0 %v781
      %834 = vmatpush.msra.mxu0 %v779
      %835 = vmatpush.msra.mxu0 %v777
      %836 = vmatmul.f32.gmra.mxu0 %v792
      %v837 = vpop.f32.mrf.mxu0
      %v838 = vadd.f32 %v789, %v837
      %839 = vdwg.mxu0
      %841 = vst [vmem:[#allocation1] ss:$2 sm:$0xff] %v225
      %v842 = vld.sshfl [vmem:[#allocation1] sm:$0xff pattern:$0x75316420]
      %v843 = vld.sshfl [vmem:[#allocation1 + $0x8] sm:$0xff pattern:$0x75316420]
      %v846 = vadd.f32 %v818, %v842
      %v847 = vadd.f32 %v838, %v843
      %v848 = vmax.f32 %v846, 0.0
      %v849 = vmax.f32 %v847, 0.0
      %v852 = vrot.slane %v849, 4
      %v853 = vsel %vm510, %v848, %v852
      %855 = vst [vmem:[%s224] sm:$0xff] %v853
      %p856 = scmp.lt.s32.totalorder %s16, 1
      %s857 = scalar_select %p856, %s16, 1
      %s858 = smul.addr %s857, 2
      %s859 = smul.addr %s858, 4
      %s860 = scalar_lea.vmem %s5, %s859
      // Predicated region
      $region41: #{resblock_plain_pallas.1} parent=39 // pred_check
        %p861 = pneg %p144
      $region42: #{resblock_plain_pallas.1} parent=39 // pred_check_branch
        %863 = sbr.rel (%p861) target = $region44
      $region43: #{resblock_plain_pallas.1} parent=39 // pred_region
        _
      $region44: #{resblock_plain_pallas.1} parent=39 // pred_fallthru
        _
    $region40: #{resblock_plain_pallas.1} parent=5 // pred_fallthru
      _
    %p864 = scmp.le.s32.totalorder 2, %s11
    // Predicated region
    $region45: #{resblock_plain_pallas.1} parent=5 // pred_check
      %p865 = pneg %p864
    $region46: #{resblock_plain_pallas.1} parent=5 // pred_check_branch
      %867 = sbr.rel (%p865) target = $region48
    $region47: #{resblock_plain_pallas.1} parent=5 // pred_region
      %s868 = ssub.s32 %s11, 2
      // Predicated region
      $region49: #{resblock_plain_pallas.1} parent=47 // pred_check
        %p869 = pneg %p150
      $region50: #{resblock_plain_pallas.1} parent=47 // pred_check_branch
        %871 = sbr.rel (%p869) target = $region52
      $region51: #{resblock_plain_pallas.1} parent=47 // pred_region
        %p872 = scmp.lt.s32.totalorder %s17, 1
        %s873 = scalar_select %p872, %s17, 1
        %s874 = smul.addr %s873, 2
        %s875 = smul.addr %s874, 4
        %s876 = scalar_lea.vmem %s5, %s875
      $region52: #{resblock_plain_pallas.1} parent=47 // pred_fallthru
        _
    $region48: #{resblock_plain_pallas.1} parent=5 // pred_fallthru
      _
  $region6: #{resblock_plain_pallas.1} parent=0 // loop_footer
    %s15 = sadd.s32 1, %s11
  $region7: #{resblock_plain_pallas.1} parent=0 // loop_footer_branch
    %10 = sbr.rel target = $region3
  $region8: #{resblock_plain_pallas.1} parent=0 // loop_exit
    _

</llo_original>
